<compile_context>
chip_gen: v7x
topology: tpu7x:2x2x1
jax: 0.10.0
libtpu: 0.0.40
codegen_flags: <defaults>
</compile_context>

<pallas_src>
import functools

import jax
import jax.numpy as jnp
from jax.experimental import pallas as pl
from jax.experimental.pallas import tpu as pltpu


_DEFAULT_VMEM_CAPACITY = 64 * 1024 * 1024   # conservative fallback (v7x per-TC VMEM)


def _vmem_capacity_bytes():
    """Physical VMEM per TensorCore; conservative fallback if the query fails."""
    try:
        info = pltpu.get_tpu_info()
        for attr in ("vmem_capacity_bytes", "vmem_bytes", "vmem_capacity"):
            v = getattr(info, attr, None)
            if v:
                return int(v)
    except Exception:
        pass
    return _DEFAULT_VMEM_CAPACITY


def _step_params():
    """Generation-aware (target_step_bytes, max_step_bytes, vmem_limit_bytes)."""
    cap = _vmem_capacity_bytes()
    if cap >= 96 * 1024 * 1024:
        # v5e / v6e: 128 MiB physical VMEM -> big steps, generous scoped limit.
        target = 14 * 1024 * 1024
        vmem_limit = 64 * 1024 * 1024
    else:
        # v7x: 64 MiB per TensorCore -> smaller steps, tighter pipelined cap.
        target = 10 * 1024 * 1024
        vmem_limit = 48 * 1024 * 1024
    # Double-buffered footprint ~= 2 * step bytes (+ compiler scratch headroom).
    max_step = vmem_limit // 2 - 4 * 1024 * 1024
    return target, max_step, vmem_limit


# ----------------------------------------------------------------------------
# Kernels: pure copies of each input tile into its static window of the output
# tile.  Every output element is written exactly once per grid step.
# ----------------------------------------------------------------------------

def _kernel_2d_slices(offsets, sizes, *refs):
    """Concat axis (possibly lane-folded) is the last axis of 2-D tiles."""
    out_ref = refs[-1]
    for in_ref, off, size in zip(refs[:-1], offsets, sizes):
        out_ref[:, off:off + size] = in_ref[...]


def _kernel_3d_slices(offsets, sizes, *refs):
    """Concat axis is the middle (sublane) axis of 3-D tiles."""
    out_ref = refs[-1]
    for in_ref, off, size in zip(refs[:-1], offsets, sizes):
        out_ref[:, off:off + size, :] = in_ref[...]


# ----------------------------------------------------------------------------
# Tile-sizing helpers.
# ----------------------------------------------------------------------------

def _split_for_two_cores_2d(B, b_blk):
    """Ensure >=2 grid steps over a sublane-mapped axis when legal (mult of 8)."""
    if pl.cdiv(B, b_blk) >= 2 or B < 16:
        return b_blk
    half = -(-B // 2)
    half = max(8, (half // 8) * 8)
    return min(b_blk, half)


def _split_for_two_cores_3d(B, b_blk, R, r_blk):
    """Ensure >=2 grid steps (leading dim is unconstrained; lane dim mult of 128)."""
    if pl.cdiv(B, b_blk) * pl.cdiv(R, r_blk) >= 2:
        return b_blk, r_blk
    if B >= 2:
        return min(b_blk, -(-B // 2)), r_blk
    if R >= 256:
        half = -(-R // 2)
        half = max(128, (half // 128) * 128)
        return b_blk, min(r_blk, half)
    return b_blk, r_blk


# ----------------------------------------------------------------------------
# Wrapper.
# ----------------------------------------------------------------------------

def concat_pallas(xs, dimension=1, *, min_pallas_bytes=1 << 20,
                  target_step_bytes=None):
    """Pallas equivalent of torch.cat(xs, dim=dimension)."""
    xs = list(xs)
    assert len(xs) >= 1
    ndim = xs[0].ndim
    axis = dimension % ndim

    # torch.cat-style dtype promotion.
    dtype = jnp.result_type(*[x.dtype for x in xs])
    xs = [x if x.dtype == dtype else x.astype(dtype) for x in xs]

    for x in xs:
        assert x.ndim == ndim
        for a in range(ndim):
            if a != axis:
                assert x.shape[a] == xs[0].shape[a]

    # Drop zero-sized concat extents (would produce 0-sized block dims).
    nonzero = [x for x in xs if x.shape[axis] > 0]
    xs = nonzero if nonzero else xs[:1]
    if len(xs) == 1:
        return xs[0]

    sizes = [int(x.shape[axis]) for x in xs]
    offsets, acc = [], 0
    for s in sizes:
        offsets.append(acc)
        acc += s
    c_total = acc

    out_shape = list(xs[0].shape)
    out_shape[axis] = c_total
    out_shape = tuple(out_shape)

    itemsize = jnp.dtype(dtype).itemsize
    out_elems = 1
    for d in out_shape:
        out_elems *= int(d)
    out_bytes = out_elems * itemsize

    # Tiny concats: pallas_call fixed cost + forced HBM round trip exceeds the
    # copy itself; let XLA fuse / elide the concatenate.
    if out_bytes < min_pallas_bytes:
        return jnp.concatenate(xs, axis=axis)

    target, max_step, vmem_limit = _step_params()
    if target_step_bytes is not None:
        target = int(target_step_bytes)
        max_step = max(max_step, 2 * target)

    B = 1
    for d in xs[0].shape[:axis]:
        B *= int(d)
    R = 1
    for d in xs[0].shape[axis + 1:]:
        R *= int(d)

    # Bytes moved per unit of (b=1, r=1): all input tiles (sum C_i) + output tile.
    bytes_per_unit = 2 * c_total * itemsize
    cost = pl.CostEstimate(flops=0, transcendentals=0, bytes_accessed=2 * out_bytes)

    # ---- Fast path: fold concat axis + trailing dims into one lane axis. ----
    # Offsets become off_i * R (multiples of 128) -> unmasked, aligned stores.
    if R > 1 and R % 128 == 0:
        row_bytes = bytes_per_unit * R
        if row_bytes <= target:
            b_fit = max(1, target // row_bytes)
            if B <= b_fit or b_fit >= 8:
                b_blk = B if B <= b_fit else (b_fit // 8) * 8
                b_blk = min(B, max(1, b_blk))
                b_blk = _split_for_two_cores_2d(B, b_blk)
                f_offsets = tuple(o * R for o in offsets)
                f_sizes = tuple(s * R for s in sizes)
                xs_c = [x.reshape(B, s * R) for x, s in zip(xs, sizes)]
                out = pl.pallas_call(
                    functools.partial(_kernel_2d_slices, f_offsets, f_sizes),
                    out_shape=jax.ShapeDtypeStruct((B, c_total * R), dtype),
                    grid=(pl.cdiv(B, b_blk),),
                    in_specs=[pl.BlockSpec((b_blk, s * R), lambda b: (b, 0))
                              for s in sizes],
                    out_specs=pl.BlockSpec((b_blk, c_total * R), lambda b: (b, 0)),
                    compiler_params=pltpu.CompilerParams(
                        dimension_semantics=("parallel",),
                        vmem_limit_bytes=vmem_limit),
                    cost_estimate=cost,
                )(*xs_c)
                return out.reshape(out_shape)

    if R > 1:
        # ---- 3-D (B, C, R) path: lane dim = flattened trailing extent. ----
        min_r = R if R <= 128 else 128
        if bytes_per_unit * min_r > max_step:
            # TODO(synk): tile the concat axis for very large channel extents.
            return jnp.concatenate(xs, axis=axis)

        row_bytes = bytes_per_unit * R
        if row_bytes <= target:
            r_blk = R
            b_blk = int(max(1, min(B, target // row_bytes)))
        else:
            b_blk = 1
            if R <= 128:
                r_blk = R
            else:
                budget_lanes = max(128, (target // bytes_per_unit) // 128 * 128)
                floor_lanes = 512 if bytes_per_unit * 512 <= max_step else 128
                cap_lanes = max(128, (max_step // bytes_per_unit) // 128 * 128)
                r_blk = min(max(budget_lanes, floor_lanes), cap_lanes)
                if r_blk >= R:
                    r_blk = R
        b_blk, r_blk = _split_for_two_cores_3d(B, b_blk, R, r_blk)

        xs_c = [x.reshape(B, s, R) for x, s in zip(xs, sizes)]
        out = pl.pallas_call(
            functools.partial(_kernel_3d_slices, tuple(offsets), tuple(sizes)),
            out_shape=jax.ShapeDtypeStruct((B, c_total, R), dtype),
            grid=(pl.cdiv(B, b_blk), pl.cdiv(R, r_blk)),
            in_specs=[pl.BlockSpec((b_blk, s, r_blk), lambda b, r: (b, 0, r))
                      for s in sizes],
            out_specs=pl.BlockSpec((b_blk, c_total, r_blk), lambda b, r: (b, 0, r)),
            compiler_params=pltpu.CompilerParams(
                dimension_semantics=("parallel", "parallel"),
                vmem_limit_bytes=vmem_limit),
            cost_estimate=cost,
        )(*xs_c)
        return out.reshape(out_shape)

    # ---- Concat axis is the last axis: 2-D (B, C), concat along lanes. ----
    min_b = B if B <= 8 else 8
    if bytes_per_unit * min_b > max_step:
        # TODO(synk): tile the concat (lane) axis for very large hidden dims.
        return jnp.concatenate(xs, axis=axis)

    b_fit = max(1, target // bytes_per_unit)
    if B <= b_fit:
        b_blk = B
    else:
        b_blk = (b_fit // 8) * 8
        if b_blk == 0:
            b_blk = min(B, 8)   # smallest legal sublane block; fits max_step by guard
    b_blk = _split_for_two_cores_2d(B, b_blk)

    xs_c = [x.reshape(B, s) for x, s in zip(xs, sizes)]
    out = pl.pallas_call(
        functools.partial(_kernel_2d_slices, tuple(offsets), tuple(sizes)),
        out_shape=jax.ShapeDtypeStruct((B, c_total), dtype),
        grid=(pl.cdiv(B, b_blk),),
        in_specs=[pl.BlockSpec((b_blk, s), lambda b: (b, 0)) for s in sizes],
        out_specs=pl.BlockSpec((b_blk, c_total), lambda b: (b, 0)),
        compiler_params=pltpu.CompilerParams(
            dimension_semantics=("parallel",),
            vmem_limit_bytes=vmem_limit),
        cost_estimate=cost,
    )(*xs_c)
    return out.reshape(out_shape)


class Concat:
    """Pallas equivalent of the PyTorch Concat module (forward = torch.cat)."""

    def __init__(self, dimension=1):
        self.d = dimension

    def __call__(self, x):
        return concat_pallas(x, dimension=self.d)


if __name__ == "__main__":
    key = jax.random.PRNGKey(0)
    ks = jax.random.split(key, 10)

    # Case 1: canonical NCHW channel concat (module default dim=1).
    # R = 16*16 = 256 (multiple of 128) -> lane-fold fast path, aligned stores.
    x1 = jax.random.normal(ks[0], (2, 4, 16, 16), dtype=jnp.float32)
    x2 = jax.random.normal(ks[1], (2, 6, 16, 16), dtype=jnp.float32)
    x3 = jax.random.normal(ks[2], (2, 2, 16, 16), dtype=jnp.float32)
    xs = [x1, x2, x3]
    ref = jnp.concatenate(xs, axis=1)
    out = jax.block_until_ready(concat_pallas(xs, dimension=1, min_pallas_bytes=0))
    assert out.shape == ref.shape == (2, 12, 16, 16)
    assert jnp.array_equal(out, ref), "lane-fold path mismatch (case 1)"

    # Case 1b: module wrapper / default dispatch (tiny input -> jnp fallback).
    out_fb = jax.block_until_ready(Concat(1)(xs))
    assert jnp.array_equal(out_fb, ref), "fallback path mismatch (case 1b)"

    # Case 2: shrink the step budget so the 3-D path tiles over (B, R).
    out_t = jax.block_until_ready(
        concat_pallas(xs, dimension=1, min_pallas_bytes=0,
                      target_step_bytes=16 * 1024))
    assert jnp.array_equal(out_t, ref), "tiled 3-D path mismatch (case 2)"

    # Case 3: bf16 lane-fold (channel offsets fold to multiples of 128).
    y1 = jax.random.normal(ks[3], (2, 16, 8, 32), dtype=jnp.bfloat16)
    y2 = jax.random.normal(ks[4], (2, 16, 8, 32), dtype=jnp.bfloat16)
    ref2 = jnp.concatenate([y1, y2], axis=1)
    out2 = jax.block_until_ready(
        concat_pallas([y1, y2], dimension=1, min_pallas_bytes=0))
    assert out2.shape == ref2.shape == (2, 32, 8, 32)
    assert jnp.array_equal(out2, ref2), "bf16 lane-fold mismatch (case 3)"

    # Case 4: R = 192 (not a multiple of 128) -> 3-D path, sublane-aligned offsets.
    z1 = jax.random.normal(ks[5], (2, 8, 8, 24), dtype=jnp.float32)
    z2 = jax.random.normal(ks[6], (2, 8, 8, 24), dtype=jnp.float32)
    ref3 = jnp.concatenate([z1, z2], axis=1)
    out3 = jax.block_until_ready(
        concat_pallas([z1, z2], dimension=1, min_pallas_bytes=0))
    assert jnp.array_equal(out3, ref3), "3-D aligned path mismatch (case 4)"

    # Case 5: R = 192, misaligned channel offsets (0, 4) -> masked slice stores.
    w1 = jax.random.normal(ks[7], (2, 4, 8, 24), dtype=jnp.float32)
    w2 = jax.random.normal(ks[8], (2, 6, 8, 24), dtype=jnp.float32)
    ref4 = jnp.concatenate([w1, w2], axis=1)
    out4 = jax.block_until_ready(
        concat_pallas([w1, w2], dimension=1, min_pallas_bytes=0))
    assert jnp.array_equal(out4, ref4), "3-D misaligned path mismatch (case 5)"

    # Case 6: concat along the last axis -> 2-D lane-axis path.
    a1 = jax.random.normal(ks[9], (2, 4, 8, 16), dtype=jnp.float32)
    a2 = jax.random.normal(ks[0], (2, 4, 8, 48), dtype=jnp.float32)
    ref5 = jnp.concatenate([a1, a2], axis=-1)
    out5 = jax.block_until_ready(
        concat_pallas([a1, a2], dimension=-1, min_pallas_bytes=0))
    assert out5.shape == ref5.shape == (2, 4, 8, 64)
    assert jnp.array_equal(out5, ref5), "last-axis path mismatch (case 6)"

    print("KERNEL_OK")
</pallas_src>

<mosaic_0001>
module attributes {stable_mosaic.version = 11 : i64} {
  func.func @_kernel_2d_slices(%arg0: i32, %arg1: memref<2x1024xf32, #tpu.memory_space<vmem>>, %arg2: memref<2x1536xf32, #tpu.memory_space<vmem>>, %arg3: memref<2x512xf32, #tpu.memory_space<vmem>>, %arg4: memref<2x3072xf32, #tpu.memory_space<vmem>>) attributes {dimension_semantics = [#tpu.dimension_semantics<parallel>], iteration_bounds = array<i64: 1>, scalar_prefetch = 0 : i64, scratch_operands = 0 : i64, tpu.core_type = #tpu.core_type<tc>, window_params = [{transform_indices = @transform_0, window_bounds = array<i64: 2, 1024>}, {transform_indices = @transform_1, window_bounds = array<i64: 2, 1536>}, {transform_indices = @transform_2, window_bounds = array<i64: 2, 512>}, {transform_indices = @transform_3, window_bounds = array<i64: 2, 3072>}]} {
    %c0 = arith.constant 0 : index
    %c0_0 = arith.constant 0 : index
    %0 = vector.load %arg1[%c0, %c0_0] : memref<2x1024xf32, #tpu.memory_space<vmem>>, vector<2x1024xf32>
    %c0_1 = arith.constant 0 : index
    %c0_2 = arith.constant 0 : index
    %1 = vector.load %arg4[%c0_1, %c0_2] : memref<2x3072xf32, #tpu.memory_space<vmem>>, vector<2x1024xf32>
    tpu.vector_store %arg4[%c0_1, %c0_2], %0 {strides = array<i32>} : memref<2x3072xf32, #tpu.memory_space<vmem>>, vector<2x1024xf32>,
    %c0_3 = arith.constant 0 : index
    %c0_4 = arith.constant 0 : index
    %2 = vector.load %arg2[%c0_3, %c0_4] : memref<2x1536xf32, #tpu.memory_space<vmem>>, vector<2x1536xf32>
    %c0_5 = arith.constant 0 : index
    %c1024 = arith.constant 1024 : index
    %3 = vector.load %arg4[%c0_5, %c1024] : memref<2x3072xf32, #tpu.memory_space<vmem>>, vector<2x1536xf32>
    tpu.vector_store %arg4[%c0_5, %c1024], %2 {strides = array<i32>} : memref<2x3072xf32, #tpu.memory_space<vmem>>, vector<2x1536xf32>,
    %c0_6 = arith.constant 0 : index
    %c0_7 = arith.constant 0 : index
    %4 = vector.load %arg3[%c0_6, %c0_7] : memref<2x512xf32, #tpu.memory_space<vmem>>, vector<2x512xf32>
    %c0_8 = arith.constant 0 : index
    %c2560 = arith.constant 2560 : index
    %5 = vector.load %arg4[%c0_8, %c2560] : memref<2x3072xf32, #tpu.memory_space<vmem>>, vector<2x512xf32>
    tpu.vector_store %arg4[%c0_8, %c2560], %4 {strides = array<i32>} : memref<2x3072xf32, #tpu.memory_space<vmem>>, vector<2x512xf32>,
    return
  }
  func.func @transform_0(%arg0: i32) -> (i32, i32) {
    %c0_i32 = arith.constant 0 : i32
    %c0_i32_0 = arith.constant 0 : i32
    return %arg0, %c0_i32 : i32, i32
  }
  func.func @transform_1(%arg0: i32) -> (i32, i32) {
    %c0_i32 = arith.constant 0 : i32
    %c0_i32_0 = arith.constant 0 : i32
    return %arg0, %c0_i32 : i32, i32
  }
  func.func @transform_2(%arg0: i32) -> (i32, i32) {
    %c0_i32 = arith.constant 0 : i32
    %c0_i32_0 = arith.constant 0 : i32
    return %arg0, %c0_i32 : i32, i32
  }
  func.func @transform_3(%arg0: i32) -> (i32, i32) {
    %c0_i32 = arith.constant 0 : i32
    %c0_i32_0 = arith.constant 0 : i32
    return %arg0, %c0_i32 : i32, i32
  }
}

</mosaic_0001>

<llo_original>
// kernel: tpu_custom_call.1
$region0: #{tpu_custom_call.1}
  #allocation0 [shape = 'u32[]', space=smem, size = 0x4, offset = 0x4, fixed_abs, tag = 'smem constant byte address 0x4 - core index']
  #allocation1 [shape = 'u32[144,128]{1,0:T(1,128)}', space=vmem, size = 0x12000, scoped, tag = 'internal scratch']
  %s0 = inlined_call_operand.hbm [shape: f32[2,1024], index: 0, kind: input, shape index: {}]
  %s1 = inlined_call_operand.hbm [shape: f32[2,1536], index: 1, kind: input, shape index: {}]
  %s2 = inlined_call_operand.hbm [shape: f32[2,512], index: 2, kind: input, shape index: {}]
  %s3 = inlined_call_operand.hbm [shape: f32[2,3072], index: 3, kind: output, shape index: {}]
  %s4 = sld [smem:[#allocation0]]
  $region34: #{tpu_custom_call.1} parent=0
    _
  %s6 = ssub.s32 1, %s4
  %s7 = scalar_select 0, %s6, %s4
  $region1: #{tpu_custom_call.1} parent=0
    #allocation2 [shape = 'u8[8192]{0}', space=vmem, size = 0x2000, scoped, tag = 'input window, operand 0, single buffered']
    #allocation3 [shape = 's32[1]{0}', space=sflag, size = 0x4, scoped, tag = 'scoped memory for tpu_custom_call.1']
    #allocation4 [shape = 's32[1]{0}', space=sflag, size = 0x4, scoped, tag = 'scoped memory for tpu_custom_call.1']
    #allocation5 [shape = 'u8[12288]{0}', space=vmem, size = 0x3000, scoped, tag = 'input window, operand 1, single buffered']
    #allocation6 [shape = 's32[1]{0}', space=sflag, size = 0x4, scoped, tag = 'scoped memory for tpu_custom_call.1']
    #allocation7 [shape = 'u8[4096]{0}', space=vmem, size = 0x1000, scoped, tag = 'input window, operand 2, single buffered']
    #allocation8 [shape = 'u8[24576]{0}', space=vmem, size = 0x6000, scoped, tag = 'output window, operand 0, single buffered']
    %8 = vsyncpa [#allocation3], 0
    %9 = vsyncpa [#allocation6], 0
    %10 = vsyncpa [#allocation4], 0
    // Predicated region
    $region2: #{tpu_custom_call.1} parent=1 // pred_check
      _
    $region3: #{tpu_custom_call.1} parent=1 // pred_check_branch
      %12 = sbr.rel (0) target = $region5
    $region4: #{tpu_custom_call.1} parent=1 // pred_region
      %s14 = ssub.s32 256, 256
      %15 = vsyncadd [#allocation3], %s14
      %s17 = sshll.u32 [#allocation2], 4
      %s18 = int_to_ptr.vmem [resolvable:$true] %s17
      %20 = dma.hbm_to_vmem [thread:$0]  %s0, 256, %s18, [#allocation3]
    $region5: #{tpu_custom_call.1} parent=1 // pred_fallthru
      _
    // Predicated region
    $region6: #{tpu_custom_call.1} parent=1 // pred_check
      _
    $region7: #{tpu_custom_call.1} parent=1 // pred_check_branch
      %22 = sbr.rel (0) target = $region9
    $region8: #{tpu_custom_call.1} parent=1 // pred_region
      %s24 = ssub.s32 384, 384
      %25 = vsyncadd [#allocation6], %s24
      %s27 = sshll.u32 [#allocation5], 4
      %s28 = int_to_ptr.vmem [resolvable:$true] %s27
      %30 = dma.hbm_to_vmem [thread:$0]  %s1, 384, %s28, [#allocation6]
    $region9: #{tpu_custom_call.1} parent=1 // pred_fallthru
      _
    // Predicated region
    $region10: #{tpu_custom_call.1} parent=1 // pred_check
      _
    $region11: #{tpu_custom_call.1} parent=1 // pred_check_branch
      %32 = sbr.rel (0) target = $region13
    $region12: #{tpu_custom_call.1} parent=1 // pred_region
      %s34 = ssub.s32 128, 128
      %35 = vsyncadd [#allocation6], %s34
      %s37 = sshll.u32 [#allocation7], 4
      %s38 = int_to_ptr.vmem [resolvable:$true] %s37
      %40 = dma.hbm_to_vmem [thread:$0]  %s2, 128, %s38, [#allocation6]
    $region13: #{tpu_custom_call.1} parent=1 // pred_fallthru
      _
    // Predicated region
    $region14: #{tpu_custom_call.1} parent=1 // pred_check
      _
    $region15: #{tpu_custom_call.1} parent=1 // pred_check_branch
      %42 = sbr.rel (0) target = $region17
    $region16: #{tpu_custom_call.1} parent=1 // pred_region
      %43 = dma.done [#allocation3], 256
    $region17: #{tpu_custom_call.1} parent=1 // pred_fallthru
      _
    // Predicated region
    $region18: #{tpu_custom_call.1} parent=1 // pred_check
      _
    $region19: #{tpu_custom_call.1} parent=1 // pred_check_branch
      %45 = sbr.rel (0) target = $region21
    $region20: #{tpu_custom_call.1} parent=1 // pred_region
      %46 = dma.done [#allocation6], 384
    $region21: #{tpu_custom_call.1} parent=1 // pred_fallthru
      _
    // Predicated region
    $region22: #{tpu_custom_call.1} parent=1 // pred_check
      _
    $region23: #{tpu_custom_call.1} parent=1 // pred_check_branch
      %48 = sbr.rel (0) target = $region25
    $region24: #{tpu_custom_call.1} parent=1 // pred_region
      %49 = dma.done [#allocation6], 128
    $region25: #{tpu_custom_call.1} parent=1 // pred_fallthru
      _
    %v50 = vld [vmem:[#allocation2] sm:$0xff]
    %v51 = vld [vmem:[#allocation2 + $0x8] sm:$0xff]
    %52 = vst [vmem:[#allocation8] sm:$0xff] %v50
    %53 = vst [vmem:[#allocation8 + $0x8] sm:$0xff] %v51
    %v54 = vld [vmem:[#allocation5] sm:$0xff]
    %v55 = vld [vmem:[#allocation5 + $0x8] sm:$0xff]
    %v56 = vld [vmem:[#allocation5 + $0x10] sm:$0xff]
    %57 = vst [vmem:[#allocation8 + $0x10] sm:$0xff] %v54
    %58 = vst [vmem:[#allocation8 + $0x18] sm:$0xff] %v55
    %59 = vst [vmem:[#allocation8 + $0x20] sm:$0xff] %v56
    %v60 = vld [vmem:[#allocation7] sm:$0xff]
    %61 = vst [vmem:[#allocation8 + $0x28] sm:$0xff] %v60
    // Predicated region
    $region26: #{tpu_custom_call.1} parent=1 // pred_check
      _
    $region27: #{tpu_custom_call.1} parent=1 // pred_check_branch
      %63 = sbr.rel (0) target = $region29
    $region28: #{tpu_custom_call.1} parent=1 // pred_region
      %s65 = ssub.s32 768, 768
      %66 = vsyncadd [#allocation4], %s65
      %s68 = sshll.u32 [#allocation8], 4
      %s69 = int_to_ptr.vmem [resolvable:$true] %s68
      %71 = dma.vmem_to_hbm [thread:$0]  %s69, 768, %s3, [#allocation4]
    $region29: #{tpu_custom_call.1} parent=1 // pred_fallthru
      _
    // Predicated region
    $region30: #{tpu_custom_call.1} parent=1 // pred_check
      _
    $region31: #{tpu_custom_call.1} parent=1 // pred_check_branch
      %73 = sbr.rel (0) target = $region33
    $region32: #{tpu_custom_call.1} parent=1 // pred_region
      %74 = dma.done [#allocation4], 768
    $region33: #{tpu_custom_call.1} parent=1 // pred_fallthru
      _
    %75 = vsyncpa [#allocation3], 1
    %76 = vsyncpa [#allocation6], 1
    %77 = vsyncpa [#allocation4], 1

</llo_original>
